<compile_context>
chip_gen: v5e
topology: v5e:2x2
jax: 0.10.0
libtpu: 0.0.40
codegen_flags: <defaults>
</compile_context>

<pallas_src>
import jax
import jax.numpy as jnp
from jax.experimental import pallas as pl
from jax.experimental.pallas import tpu as pltpu


def _linreg_kernel(w_ref, b_ref, x_ref, o_ref):
    # w_ref / b_ref: shape-(1,) f32 scalars in SMEM.  x_ref / o_ref: VMEM
    # row-tiles.  Upcast-in-kernel keeps HBM traffic at the native width
    # (e.g. 2 B/elem for bf16 inputs); the cast + mul + add are free filler
    # on the VPU since the kernel is DMA-bound.
    x = x_ref[...].astype(jnp.float32)
    o_ref[...] = (w_ref[0] * x + b_ref[0]).astype(o_ref.dtype)


def _round_up(x: int, m: int) -> int:
    return ((x + m - 1) // m) * m


# In-tile + out-tile byte budget per grid step; double-buffered => ~2x live.
_TILE_BYTES_BUDGET = 16 * 1024 * 1024
# Explicit scoped-VMEM headroom: 2x(in+out) tiles (~32 MiB) + slack.  Kept
# explicit because v5e's default scoped limit is only 16 MiB; 48 MiB stays
# comfortably under v7x's 64 MiB physical VMEM per TensorCore.
_VMEM_LIMIT_BYTES = 48 * 1024 * 1024
# Keep the grid at least this deep so the "parallel" axis shards evenly
# across v7x's two TensorCores and each core's pipeline stays warm.
_MIN_TILES = 8


def linear_regression_forward(x: jax.Array, weights: jax.Array, bias: jax.Array) -> jax.Array:
    """y = weights * x + bias, with shape-(1,) weights/bias broadcast over x.

    Elementwise, so any input rank is accepted: x is viewed as a lane-dense
    (rows, LANES) slab (free reshape for LANES-aligned sizes), streamed
    through a row-tiled pipelined Pallas kernel, and any <LANES leftover
    tail is computed with plain jnp.
    """
    orig_shape = x.shape
    # PyTorch type promotion: float32 params promote the result
    # (bf16 / int x -> float32 output).
    out_dtype = jnp.result_type(x.dtype, jnp.float32)
    n = int(x.size)

    w32 = weights.astype(jnp.float32)
    b32 = bias.astype(jnp.float32)

    if n == 0:
        return jnp.zeros(orig_shape, out_dtype)

    # Lane-dense slab width: multiple of 128; wide for large inputs.
    LANES = 512 if n >= 512 * 512 else 128
    tail = n % LANES
    n_bulk = n - tail

    x_flat = jnp.ravel(x)  # free (view) for contiguous inputs
    parts = []

    if n_bulk > 0:
        rows = n_bulk // LANES
        x_item = jnp.dtype(x.dtype).itemsize
        out_item = jnp.dtype(out_dtype).itemsize
        # Native sublane multiple for the narrowest dtype touched
        # (f32 -> 8, bf16 -> 16, int8 -> 32).
        sub = max(8, 32 // min(x_item, out_item))

        bytes_per_row = LANES * (x_item + out_item)
        budget_rows = max(sub, (_TILE_BYTES_BUDGET // bytes_per_row) // sub * sub)
        balanced_rows = _round_up(pl.cdiv(rows, _MIN_TILES), sub)
        tile_rows = max(sub, min(budget_rows, balanced_rows))
        if tile_rows >= rows:
            # Single full-extent block (full array dim is always a legal block dim).
            tile_rows = rows
        grid = (pl.cdiv(rows, tile_rows),)  # ragged last block handled by Pallas

        x_slab = x_flat[:n_bulk].reshape(rows, LANES)

        y_slab = pl.pallas_call(
            _linreg_kernel,
            out_shape=jax.ShapeDtypeStruct((rows, LANES), out_dtype),
            grid_spec=pltpu.PrefetchScalarGridSpec(
                num_scalar_prefetch=0,
                grid=grid,
                in_specs=[
                    pl.BlockSpec(memory_space=pltpu.SMEM),               # weights (1,)
                    pl.BlockSpec(memory_space=pltpu.SMEM),               # bias    (1,)
                    pl.BlockSpec((tile_rows, LANES), lambda i: (i, 0)),  # x row-tile
                ],
                out_specs=pl.BlockSpec((tile_rows, LANES), lambda i: (i, 0)),
            ),
            compiler_params=pltpu.CompilerParams(
                # Row-tiles are independent: "parallel" lets the runtime shard
                # the grid across TensorCores where there are >1 (v7x).
                dimension_semantics=("parallel",),
                vmem_limit_bytes=_VMEM_LIMIT_BYTES,
            ),
        )(w32, b32, x_slab)
        parts.append(y_slab.reshape(-1))

    if tail > 0:
        # <LANES leftover elements: plain jnp (negligible work, avoids a full
        # jnp.pad pass on the input and a slice pass on the output).
        x_tail = x_flat[n_bulk:].astype(jnp.float32)
        parts.append((w32[0] * x_tail + b32[0]).astype(out_dtype))

    y_flat = parts[0] if len(parts) == 1 else jnp.concatenate(parts)
    return y_flat.reshape(orig_shape)


if __name__ == "__main__":
    key = jax.random.PRNGKey(0)
    k_w, k_b, k_x1, k_x2, k_x3 = jax.random.split(key, 5)

    # Deterministic "torch.rand(1)"-style parameter init (uniform [0, 1), float32).
    weights = jax.random.uniform(k_w, (1,), dtype=jnp.float32)
    bias = jax.random.uniform(k_b, (1,), dtype=jnp.float32)

    # 1) Lane-aligned f32 input: zero-copy slab path, single full block.
    x1 = jax.random.uniform(k_x1, (8, 128), dtype=jnp.float32)
    y1 = jax.block_until_ready(linear_regression_forward(x1, weights, bias))
    assert y1.shape == x1.shape and y1.dtype == jnp.float32
    assert jnp.allclose(y1, weights * x1 + bias, atol=1e-6, rtol=1e-6)

    # 2) Non-aligned input: kernel handles the 128-aligned bulk, jnp the tail.
    x2 = jax.random.uniform(k_x2, (3, 5, 11), dtype=jnp.float32)
    y2 = jax.block_until_ready(linear_regression_forward(x2, weights, bias))
    assert y2.shape == x2.shape and y2.dtype == jnp.float32
    assert jnp.allclose(y2, weights * x2 + bias, atol=1e-6, rtol=1e-6)

    # 3) bf16 input: streamed at 2 B/elem, upcast in-kernel; output promotes
    #    to float32 (PyTorch semantics: f32 params * bf16 tensor -> f32).
    x3 = jax.random.uniform(k_x3, (16, 256), dtype=jnp.float32).astype(jnp.bfloat16)
    y3 = jax.block_until_ready(linear_regression_forward(x3, weights, bias))
    y3_ref = weights * x3.astype(jnp.float32) + bias
    assert y3.shape == x3.shape and y3.dtype == jnp.float32
    assert jnp.allclose(y3, y3_ref, atol=1e-6, rtol=1e-6)

    print("KERNEL_OK")
</pallas_src>

<mosaic_0001>
module attributes {stable_mosaic.version = 11 : i64} {
  func.func @_linreg_kernel(%arg0: i32, %arg1: memref<1xf32, #tpu.memory_space<smem>>, %arg2: memref<1xf32, #tpu.memory_space<smem>>, %arg3: memref<8x128xf32, #tpu.memory_space<vmem>>, %arg4: memref<8x128xf32, #tpu.memory_space<vmem>>) attributes {dimension_semantics = [#tpu.dimension_semantics<parallel>], iteration_bounds = array<i64: 1>, scalar_prefetch = 0 : i64, scratch_operands = 0 : i64, tpu.core_type = #tpu.core_type<tc>, window_params = [{transform_indices = @transform_0, window_bounds = array<i64: 1>}, {transform_indices = @transform_1, window_bounds = array<i64: 1>}, {transform_indices = @transform_2, window_bounds = array<i64: 8, 128>}, {transform_indices = @transform_3, window_bounds = array<i64: 8, 128>}]} {
    %c0 = arith.constant 0 : index
    %c0_0 = arith.constant 0 : index
    %0 = vector.load %arg3[%c0, %c0_0] : memref<8x128xf32, #tpu.memory_space<vmem>>, vector<8x128xf32>
    %c0_1 = arith.constant 0 : index
    %1 = memref.load %arg1[%c0_1] : memref<1xf32, #tpu.memory_space<smem>>
    %2 = vector.broadcast %1 : f32 to vector<8x128xf32>
    %3 = arith.mulf %2, %0 : vector<8x128xf32>
    %c0_2 = arith.constant 0 : index
    %4 = memref.load %arg2[%c0_2] : memref<1xf32, #tpu.memory_space<smem>>
    %5 = vector.broadcast %4 : f32 to vector<8x128xf32>
    %6 = arith.addf %3, %5 : vector<8x128xf32>
    %c0_3 = arith.constant 0 : index
    %c0_4 = arith.constant 0 : index
    %7 = vector.load %arg4[%c0_3, %c0_4] : memref<8x128xf32, #tpu.memory_space<vmem>>, vector<8x128xf32>
    tpu.vector_store %arg4[%c0_3, %c0_4], %6 {strides = array<i32>} : memref<8x128xf32, #tpu.memory_space<vmem>>, vector<8x128xf32>,
    return
  }
  func.func @transform_0(%arg0: i32) -> i32 {
    %c0_i32 = arith.constant 0 : i32
    %c0_i32_0 = arith.constant 0 : i32
    return %c0_i32 : i32
  }
  func.func @transform_1(%arg0: i32) -> i32 {
    %c0_i32 = arith.constant 0 : i32
    %c0_i32_0 = arith.constant 0 : i32
    return %c0_i32 : i32
  }
  func.func @transform_2(%arg0: i32) -> (i32, i32) {
    %c0_i32 = arith.constant 0 : i32
    %c0_i32_0 = arith.constant 0 : i32
    return %arg0, %c0_i32 : i32, i32
  }
  func.func @transform_3(%arg0: i32) -> (i32, i32) {
    %c0_i32 = arith.constant 0 : i32
    %c0_i32_0 = arith.constant 0 : i32
    return %arg0, %c0_i32 : i32, i32
  }
}

</mosaic_0001>

<llo_original>
// kernel: tpu_custom_call.1
$region0: #{tpu_custom_call.1}
  #allocation0 [shape = 'u32[]', space=smem, size = 0x4, offset = 0x4, fixed_abs, tag = 'smem constant byte address 0x4 - core index']
  #allocation1 [shape = 'u32[72,128]{1,0:T(1,128)}', space=vmem, size = 0x9000, scoped, tag = 'internal scratch']
  #allocation2 [shape = 'f32[1]{0:T(128)S(6)}', space=smem, size = 0x200, scoped, tag = 'scoped memory for tpu_custom_call.1']
  #allocation3 [shape = 'f32[1]{0:T(128)S(6)}', space=smem, size = 0x200, scoped, tag = 'scoped memory for tpu_custom_call.1']
  %s0 = inlined_call_operand.<no memory space> [shape: f32[1], index: 0, kind: input, shape index: {}]
  %s1 = inlined_call_operand.<no memory space> [shape: f32[1], index: 1, kind: input, shape index: {}]
  %s2 = inlined_call_operand.hbm [shape: f32[8,128], index: 2, kind: input, shape index: {}]
  %s3 = inlined_call_operand.hbm [shape: f32[8,128], index: 3, kind: output, shape index: {}]
  %s4 = sld [smem:[#allocation0]]
  $region26: #{tpu_custom_call.1} parent=0
    _
  %s6 = ssub.s32 1, %s4
  %s7 = scalar_select 0, %s6, %s4
  %8 = sst [smem:[#allocation2]] %s0
  %9 = sst [smem:[#allocation3]] %s1
  $region1: #{tpu_custom_call.1} parent=0
    #allocation4 [shape = 'u8[4096]{0}', space=vmem, size = 0x1000, scoped, tag = 'input window, operand 2, single buffered']
    #allocation5 [shape = 's32[1]{0}', space=sflag, size = 0x4, scoped, tag = 'scoped memory for tpu_custom_call.1']
    #allocation6 [shape = 's32[1]{0}', space=sflag, size = 0x4, scoped, tag = 'scoped memory for tpu_custom_call.1']
    #allocation7 [shape = 'u8[4096]{0}', space=vmem, size = 0x1000, scoped, tag = 'output window, operand 0, single buffered']
    %10 = vsyncpa [#allocation5], 0
    %11 = vsyncpa [#allocation6], 0
    // Predicated region
    $region2: #{tpu_custom_call.1} parent=1 // pred_check
      _
    $region3: #{tpu_custom_call.1} parent=1 // pred_check_branch
      %13 = sbr.rel (0) target = $region5
    $region4: #{tpu_custom_call.1} parent=1 // pred_region
      _
    $region5: #{tpu_custom_call.1} parent=1 // pred_fallthru
      _
    // Predicated region
    $region6: #{tpu_custom_call.1} parent=1 // pred_check
      _
    $region7: #{tpu_custom_call.1} parent=1 // pred_check_branch
      %15 = sbr.rel (0) target = $region9
    $region8: #{tpu_custom_call.1} parent=1 // pred_region
      _
    $region9: #{tpu_custom_call.1} parent=1 // pred_fallthru
      _
    // Predicated region
    $region10: #{tpu_custom_call.1} parent=1 // pred_check
      _
    $region11: #{tpu_custom_call.1} parent=1 // pred_check_branch
      %17 = sbr.rel (0) target = $region13
    $region12: #{tpu_custom_call.1} parent=1 // pred_region
      %19 = vsyncadd [#allocation5], 0
      %s21 = sshll.u32 %s2, 4
      %s22 = int_to_ptr.hbm [resolvable:$true] %s21
      %s23 = sshll.u32 [#allocation4], 4
      %s24 = int_to_ptr.vmem [resolvable:$true] %s23
      %26 = dma.hbm_to_vmem [thread:$0]  %s22, 128, %s24, [#allocation5]
    $region13: #{tpu_custom_call.1} parent=1 // pred_fallthru
      _
    // Predicated region
    $region14: #{tpu_custom_call.1} parent=1 // pred_check
      _
    $region15: #{tpu_custom_call.1} parent=1 // pred_check_branch
      %28 = sbr.rel (0) target = $region17
    $region16: #{tpu_custom_call.1} parent=1 // pred_region
      %30 = dma.done [#allocation5], 128
    $region17: #{tpu_custom_call.1} parent=1 // pred_fallthru
      _
    %v31 = vld [vmem:[#allocation4] sm:$0xff]
    %s32 = sld [smem:[#allocation2]]
    %v33 = vstv %s32
    %v34 = vmul.f32 %v33, %v31
    %s35 = sld [smem:[#allocation3]]
    %v36 = vstv %s35
    %v37 = vadd.f32 %v34, %v36
    %38 = vst [vmem:[#allocation7] sm:$0xff] %v37
    // Predicated region
    $region18: #{tpu_custom_call.1} parent=1 // pred_check
      _
    $region19: #{tpu_custom_call.1} parent=1 // pred_check_branch
      %40 = sbr.rel (0) target = $region21
    $region20: #{tpu_custom_call.1} parent=1 // pred_region
      %42 = vsyncadd [#allocation6], 0
      %s44 = sshll.u32 [#allocation7], 4
      %s45 = int_to_ptr.vmem [resolvable:$true] %s44
      %s46 = sshll.u32 %s3, 4
      %s47 = int_to_ptr.hbm [resolvable:$true] %s46
      %49 = dma.vmem_to_hbm [thread:$0]  %s45, 128, %s47, [#allocation6]
    $region21: #{tpu_custom_call.1} parent=1 // pred_fallthru
      _
    // Predicated region
    $region22: #{tpu_custom_call.1} parent=1 // pred_check
      _
    $region23: #{tpu_custom_call.1} parent=1 // pred_check_branch
      %51 = sbr.rel (0) target = $region25
    $region24: #{tpu_custom_call.1} parent=1 // pred_region
      %53 = dma.done [#allocation6], 128
    $region25: #{tpu_custom_call.1} parent=1 // pred_fallthru
      _
    %54 = vsyncpa [#allocation5], 1
    %55 = vsyncpa [#allocation6], 1

</llo_original>
